<compile_context>
chip_gen: v7x
topology: tpu7x:2x2x1
jax: 0.10.0
libtpu: 0.0.40
codegen_flags: <defaults>
</compile_context>

<pallas_src>
import functools

import jax
import jax.numpy as jnp
from jax.experimental import pallas as pl
from jax.experimental.pallas import tpu as pltpu


def _concat_conv1x1_kernel(x_ref, w_ref, b_ref, o_ref):
    # x_ref: (1, C_in, ts)   input pixels (channels on sublanes, spatial on lanes)
    # w_ref: (Ctot, C_in)    concatenated 1x1-conv weights of all nets (resident)
    # b_ref: (Ctot, 1)       concatenated biases (resident)
    # o_ref: (1, Ctot, ts)   channel-concatenated output slab
    x = x_ref[0]                                              # (C_in, ts)
    acc = jnp.dot(w_ref[...], x, preferred_element_type=jnp.float32)
    acc = acc + b_ref[...]                                    # broadcast over lanes
    o_ref[0] = acc.astype(o_ref.dtype)


def _pick_spatial_tile(hw, max_ts):
    """Largest lane-aligned tile that evenly divides hw (no tail masking needed)."""
    if hw <= max_ts:
        return hw
    if hw % 128 == 0:
        start = (min(max_ts, hw) // 128) * 128
        for ts in range(start, 0, -128):
            if hw % ts == 0:
                return ts
    # Full-extent block is always a legal block shape; for extreme H*W this may
    # need a raised vmem_limit_bytes, irrelevant at YOLACT-scale inputs.
    return hw


@functools.partial(jax.jit, static_argnames=("max_ts",))
def concat_forward(x_nchw, weights, biases, *, max_ts=2048):
    """Forward pass of Concat([Conv2d(C_in, C_out, 1)]*N, {}).

    x_nchw : [B, C_in, H, W]            (PyTorch NCHW convention)
    weights: [NUM_NETS, C_out, C_in]    (Conv2d weight with the 1x1 squeezed)
    biases : [NUM_NETS, C_out]
    returns: [B, NUM_NETS*C_out, H, W]
    """
    B, C_in, H, W = x_nchw.shape
    num_nets, C_out, _ = weights.shape
    Ctot = num_nets * C_out
    HW = H * W

    # Zero-copy views: the kernel works directly in NCHW orientation.
    x_3d = x_nchw.reshape(B, C_in, HW)        # [B, C_in, H*W]
    w_cat = weights.reshape(Ctot, C_in)       # cat over nets == torch.cat(dim=1)
    b_cat = biases.reshape(Ctot, 1)

    ts = _pick_spatial_tile(HW, max_ts)
    assert HW % ts == 0
    grid = (B, HW // ts)

    out_3d = pl.pallas_call(
        _concat_conv1x1_kernel,
        out_shape=jax.ShapeDtypeStruct((B, Ctot, HW), x_nchw.dtype),
        grid=grid,
        in_specs=[
            pl.BlockSpec((1, C_in, ts), lambda b, t: (b, 0, t)),
            pl.BlockSpec((Ctot, C_in), lambda b, t: (0, 0)),   # constant -> resident
            pl.BlockSpec((Ctot, 1), lambda b, t: (0, 0)),      # constant -> resident
        ],
        out_specs=pl.BlockSpec((1, Ctot, ts), lambda b, t: (b, 0, t)),
        compiler_params=pltpu.CompilerParams(
            dimension_semantics=("parallel", "parallel")
        ),
    )(x_3d, w_cat, b_cat)

    # [B, Ctot, H*W] -> NCHW, zero-copy.
    return out_3d.reshape(B, Ctot, H, W)


if __name__ == "__main__":
    # Small synthetic config consistent with the module's forward.
    B, C_in, H, W = 2, 4, 16, 16
    NUM_NETS = 3
    C_OUT = 128  # per-net output channels

    key = jax.random.PRNGKey(0)
    kx, kw, kb = jax.random.split(key, 3)

    x = jax.random.normal(kx, (B, C_in, H, W), dtype=jnp.float32)
    # Deterministic per-net 1x1 conv parameters (synthetic, not a checkpoint).
    weights = 0.1 * jax.random.normal(kw, (NUM_NETS, C_OUT, C_in), dtype=jnp.float32)
    biases = 0.1 * jax.random.normal(kb, (NUM_NETS, C_OUT), dtype=jnp.float32)

    out = concat_forward(x, weights, biases)
    out = jax.block_until_ready(out)

    # Pure-JAX reference: per-net 1x1 conv (NCHW) then concat along channels.
    refs = []
    for n in range(NUM_NETS):
        y = jnp.einsum(
            "oc,bchw->bohw", weights[n], x, precision=jax.lax.Precision.HIGHEST
        ) + biases[n][None, :, None, None]
        refs.append(y)
    ref = jnp.concatenate(refs, axis=1)

    assert out.shape == (B, NUM_NETS * C_OUT, H, W), out.shape
    assert jnp.allclose(out, ref, atol=1e-4, rtol=1e-4)

    print("KERNEL_OK")
</pallas_src>

<mosaic_0001>
module attributes {stable_mosaic.version = 11 : i64} {
  func.func @_concat_conv1x1_kernel(%arg0: i32, %arg1: i32, %arg2: memref<1x4x256xf32, #tpu.memory_space<vmem>>, %arg3: memref<384x4xf32, #tpu.memory_space<vmem>>, %arg4: memref<384x1xf32, #tpu.memory_space<vmem>>, %arg5: memref<1x384x256xf32, #tpu.memory_space<vmem>>) attributes {dimension_semantics = [#tpu.dimension_semantics<parallel>, #tpu.dimension_semantics<parallel>], iteration_bounds = array<i64: 2, 1>, scalar_prefetch = 0 : i64, scratch_operands = 0 : i64, tpu.core_type = #tpu.core_type<tc>, window_params = [{transform_indices = @transform_0, window_bounds = array<i64: 1, 4, 256>}, {pipeline_mode = #tpu.pipeline_mode<synchronous>, transform_indices = @transform_1, window_bounds = array<i64: 384, 4>}, {pipeline_mode = #tpu.pipeline_mode<synchronous>, transform_indices = @transform_2, window_bounds = array<i64: 384, 1>}, {transform_indices = @transform_3, window_bounds = array<i64: 1, 384, 256>}]} {
    %c0 = arith.constant 0 : index
    %c0_0 = arith.constant 0 : index
    %c0_1 = arith.constant 0 : index
    %0 = vector.load %arg2[%c0, %c0_0, %c0_1] : memref<1x4x256xf32, #tpu.memory_space<vmem>>, vector<1x4x256xf32>
    %1 = vector.shape_cast %0 : vector<1x4x256xf32> to vector<4x256xf32>
    %c0_2 = arith.constant 0 : index
    %c0_3 = arith.constant 0 : index
    %2 = vector.load %arg3[%c0_2, %c0_3] : memref<384x4xf32, #tpu.memory_space<vmem>>, vector<384x4xf32>
    %cst = arith.constant dense<0.000000e+00> : vector<384x256xf32>
    %3 = tpu.matmul %2, %1, %cst {dimension_numbers = #tpu.dot_dimension_numbers<[1], [0], [0], [1], [0, 0, 1, 1], [], []>} : vector<384x4xf32>, vector<4x256xf32>, vector<384x256xf32> -> vector<384x256xf32>
    %c0_4 = arith.constant 0 : index
    %c0_5 = arith.constant 0 : index
    %4 = vector.load %arg4[%c0_4, %c0_5] : memref<384x1xf32, #tpu.memory_space<vmem>>, vector<384x1xf32>
    %5 = vector.broadcast %4 : vector<384x1xf32> to vector<384x256xf32>
    %6 = arith.addf %3, %5 : vector<384x256xf32>
    %c0_6 = arith.constant 0 : index
    %c0_7 = arith.constant 0 : index
    %c0_8 = arith.constant 0 : index
    %7 = vector.load %arg5[%c0_6, %c0_7, %c0_8] : memref<1x384x256xf32, #tpu.memory_space<vmem>>, vector<1x384x256xf32>
    %8 = vector.shape_cast %7 : vector<1x384x256xf32> to vector<384x256xf32>
    %9 = vector.shape_cast %6 : vector<384x256xf32> to vector<1x384x256xf32>
    tpu.vector_store %arg5[%c0_6, %c0_7, %c0_8], %9 {strides = array<i32>} : memref<1x384x256xf32, #tpu.memory_space<vmem>>, vector<1x384x256xf32>,
    return
  }
  func.func @transform_0(%arg0: i32, %arg1: i32) -> (i32, i32, i32) {
    %c0_i32 = arith.constant 0 : i32
    %c0_i32_0 = arith.constant 0 : i32
    return %arg0, %c0_i32, %arg1 : i32, i32, i32
  }
  func.func @transform_1(%arg0: i32, %arg1: i32) -> (i32, i32) {
    %c0_i32 = arith.constant 0 : i32
    %c0_i32_0 = arith.constant 0 : i32
    %c0_i32_1 = arith.constant 0 : i32
    return %c0_i32, %c0_i32_0 : i32, i32
  }
  func.func @transform_2(%arg0: i32, %arg1: i32) -> (i32, i32) {
    %c0_i32 = arith.constant 0 : i32
    %c0_i32_0 = arith.constant 0 : i32
    %c0_i32_1 = arith.constant 0 : i32
    return %c0_i32, %c0_i32_0 : i32, i32
  }
  func.func @transform_3(%arg0: i32, %arg1: i32) -> (i32, i32, i32) {
    %c0_i32 = arith.constant 0 : i32
    %c0_i32_0 = arith.constant 0 : i32
    return %arg0, %c0_i32, %arg1 : i32, i32, i32
  }
}

</mosaic_0001>

<llo_original>
// kernel: concat_forward.1
$region0: #{concat_forward.1}
  #allocation0 [shape = 'u32[]', space=smem, size = 0x4, offset = 0x4, fixed_abs, tag = 'smem constant byte address 0x4 - core index']
  #allocation1 [shape = 'u32[144,128]{1,0:T(1,128)}', space=vmem, size = 0x12000, scoped, tag = 'internal scratch']
  %s0 = inlined_call_operand.vmem [shape: f32[2,4,256], index: 0, kind: input, shape index: {}]
  %s1 = inlined_call_operand.vmem [shape: f32[384,4], index: 1, kind: input, shape index: {}]
  %s2 = inlined_call_operand.vmem [shape: f32[384,1], index: 2, kind: input, shape index: {}]
  %s3 = inlined_call_operand.vmem [shape: f32[2,384,256], index: 3, kind: output, shape index: {}]
  %s4 = sld [smem:[#allocation0]]
  $region45: #{concat_forward.1} parent=0
    _
  %s6 = ssub.s32 1, %s4
  %s7 = scalar_select 0, %s6, %s4
  loop: start=0, step=1, limit=4
  $region2: #{concat_forward.1} parent=0 // loop_pre_header
    _
  $region3: #{concat_forward.1} parent=0 // loop_header
    %s9 = sphi 0, %s13
    %p10 = scmp.ge.s32.totalorder %s9, 4
    %s16 = sphi 0, %s28
    %s17 = sphi 0, %s24
    %s18 = sphi 0, %s16
    %s19 = sphi 0, %s17
    %s20 = sphi 0, %s18
    %s21 = sphi 0, %s19
    %s33 = sphi 0, %s35
    %s36 = sphi 0, %s33
    %s37 = sphi 0, %s36
    %s53 = sphi 0, %s37
    %s57 = sphi 0, %s57
    %s59 = sphi 0, %s57
    %s60 = sphi 0, %s59
    %s74 = sphi 0, %s60
    %s78 = sphi 0, %s78
    %s80 = sphi 0, %s78
    %s81 = sphi 0, %s80
    %s95 = sphi 0, %s81
    %s103 = sphi 0, %s105
    %s106 = sphi 0, %s103
    %s107 = sphi 0, %s106
    %s123 = sphi 0, %s107
  $region4: #{concat_forward.1} parent=0 // loop_header_branch
    %12 = sbr.rel (%p10) target = $region8
  $region5: #{concat_forward.1} parent=0 // loop_body
    %s14 = ssub.s32 %s9, 1
    %s15 = ssub.s32 %s9, 2
    %s22 = sadd.s32 1, %s17
    %p23 = scmp.ge.s32.totalorder %s22, 1
    %s24 = scalar_select %p23, 0, %s22
    %s25 = sadd.s32 1, %s16
    %s26 = scalar_select %p23, %s25, %s16
    %p27 = scmp.ge.s32.totalorder %s26, 2
    %s28 = scalar_select %p27, 0, %s26
    %s29 = ssub.s32 %s16, %s28
    %s30 = ssub.s32 %s17, %s24
    %s31 = sor.u32 %s29, %s30
    %p32 = scmp.eq.s32.totalorder %s31, 0
    %s34 = sadd.s32 %s33, 1
    %s35 = scalar_select %p32, %s33, %s34
    %p38 = pneg %p32
    %p39 = scmp.eq.s32.totalorder %s9, 1
    %p40 = por %p38, %p39
    %p41 = scmp.ne.s32.totalorder %s33, %s36
    %p42 = scmp.eq.s32.totalorder %s9, 0
    %p43 = por %p41, %p42
    %p44 = scmp.ne.s32.totalorder %s33, %s36
    %p45 = scmp.eq.s32.totalorder %s14, 1
    %p46 = por %p44, %p45
    %p47 = scmp.ne.s32.totalorder %s36, %s37
    %p48 = scmp.eq.s32.totalorder %s14, 0
    %p49 = por %p47, %p48
    %p50 = scmp.ne.s32.totalorder %s36, %s37
    %p51 = scmp.eq.s32.totalorder %s15, 1
    %p52 = por %p50, %p51
    %p54 = scmp.ne.s32.totalorder %s37, %s53
    %p55 = scmp.eq.s32.totalorder %s15, 0
    %p56 = por %p54, %p55
    %s58 = sadd.s32 %s57, 1
    %p61 = scmp.eq.s32.totalorder %s9, 1
    %p62 = scmp.ne.s32.totalorder %s57, %s59
    %p63 = scmp.eq.s32.totalorder %s9, 0
    %p64 = por %p62, %p63
    %p65 = scmp.ne.s32.totalorder %s57, %s59
    %p66 = scmp.eq.s32.totalorder %s14, 1
    %p67 = por %p65, %p66
    %p68 = scmp.ne.s32.totalorder %s59, %s60
    %p69 = scmp.eq.s32.totalorder %s14, 0
    %p70 = por %p68, %p69
    %p71 = scmp.ne.s32.totalorder %s59, %s60
    %p72 = scmp.eq.s32.totalorder %s15, 1
    %p73 = por %p71, %p72
    %p75 = scmp.ne.s32.totalorder %s60, %s74
    %p76 = scmp.eq.s32.totalorder %s15, 0
    %p77 = por %p75, %p76
    %s79 = sadd.s32 %s78, 1
    %p82 = scmp.eq.s32.totalorder %s9, 1
    %p83 = scmp.ne.s32.totalorder %s78, %s80
    %p84 = scmp.eq.s32.totalorder %s9, 0
    %p85 = por %p83, %p84
    %p86 = scmp.ne.s32.totalorder %s78, %s80
    %p87 = scmp.eq.s32.totalorder %s14, 1
    %p88 = por %p86, %p87
    %p89 = scmp.ne.s32.totalorder %s80, %s81
    %p90 = scmp.eq.s32.totalorder %s14, 0
    %p91 = por %p89, %p90
    %p92 = scmp.ne.s32.totalorder %s80, %s81
    %p93 = scmp.eq.s32.totalorder %s15, 1
    %p94 = por %p92, %p93
    %p96 = scmp.ne.s32.totalorder %s81, %s95
    %p97 = scmp.eq.s32.totalorder %s15, 0
    %p98 = por %p96, %p97
    %s99 = ssub.s32 %s16, %s28
    %s100 = ssub.s32 %s17, %s24
    %s101 = sor.u32 %s99, %s100
    %p102 = scmp.eq.s32.totalorder %s101, 0
    %s104 = sadd.s32 %s103, 1
    %s105 = scalar_select %p102, %s103, %s104
    %p108 = pneg %p102
    %p109 = scmp.eq.s32.totalorder %s9, 1
    %p110 = por %p108, %p109
    %p111 = scmp.ne.s32.totalorder %s103, %s106
    %p112 = scmp.eq.s32.totalorder %s9, 0
    %p113 = por %p111, %p112
    %p114 = scmp.ne.s32.totalorder %s103, %s106
    %p115 = scmp.eq.s32.totalorder %s14, 1
    %p116 = por %p114, %p115
    %p117 = scmp.ne.s32.totalorder %s106, %s107
    %p118 = scmp.eq.s32.totalorder %s14, 0
    %p119 = por %p117, %p118
    %p120 = scmp.ne.s32.totalorder %s106, %s107
    %p121 = scmp.eq.s32.totalorder %s15, 1
    %p122 = por %p120, %p121
    %p124 = scmp.ne.s32.totalorder %s107, %s123
    %p125 = scmp.eq.s32.totalorder %s15, 0
    %p126 = por %p124, %p125
    %p127 = scmp.le.s32.totalorder 1, %s9
    %p128 = scmp.lt.s32.totalorder %s9, 3
    %p129 = pnand %p127, %p128
    %p130 = pneg %p129
    // Predicated region
    $region9: #{concat_forward.1} parent=5 // pred_check
      _
    $region10: #{concat_forward.1} parent=5 // pred_check_branch
      %132 = sbr.rel (%p129) target = $region12
    $region11: #{concat_forward.1} parent=5 // pred_region
      %s133 = ssub.s32 %s9, 1
      // Predicated region
      $region13: #{concat_forward.1} parent=11 // pred_check
        %p134 = pneg %p70
      $region14: #{concat_forward.1} parent=11 // pred_check_branch
        %136 = sbr.rel (%p134) target = $region16
      $region15: #{concat_forward.1} parent=11 // pred_region
        _
      $region16: #{concat_forward.1} parent=11 // pred_fallthru
        _
      // Predicated region
      $region17: #{concat_forward.1} parent=11 // pred_check
        %p137 = pneg %p91
      $region18: #{concat_forward.1} parent=11 // pred_check_branch
        %139 = sbr.rel (%p137) target = $region20
      $region19: #{concat_forward.1} parent=11 // pred_region
        _
      $region20: #{concat_forward.1} parent=11 // pred_fallthru
        _
    $region12: #{concat_forward.1} parent=5 // pred_fallthru
      _
    %p140 = scmp.lt.s32.totalorder %s9, 2
    // Predicated region
    $region21: #{concat_forward.1} parent=5 // pred_check
      %p141 = pneg %p140
    $region22: #{concat_forward.1} parent=5 // pred_check_branch
      %143 = sbr.rel (%p141) target = $region24
    $region23: #{concat_forward.1} parent=5 // pred_region
      // Predicated region
      $region25: #{concat_forward.1} parent=23 // pred_check
        %p144 = pneg %p43
      $region26: #{concat_forward.1} parent=23 // pred_check_branch
        %146 = sbr.rel (%p144) target = $region28
      $region27: #{concat_forward.1} parent=23 // pred_region
        %s147 = smul.u32 2, %s17
        %p148 = scmp.lt.s32.totalorder %s16, 1
        %s149 = scalar_select %p148, %s16, 1
        %p150 = scmp.lt.s32.totalorder %s147, 1
        %s151 = scalar_select %p150, %s147, 1
        %s152 = smul.addr %s149, 2
        %s153 = sadd.s32 %s151, %s152
        %s154 = smul.addr %s153, 4
        %s155 = scalar_lea.vmem %s0, %s154
        %s156 = smul.u32 2, %s17
      $region28: #{concat_forward.1} parent=23 // pred_fallthru
        _
    $region24: #{concat_forward.1} parent=5 // pred_fallthru
      _
    %p157 = scmp.le.s32.totalorder 1, %s9
    %p158 = scmp.lt.s32.totalorder %s9, 3
    %p159 = pnand %p157, %p158
    %p160 = pneg %p159
    // Predicated region
    $region29: #{concat_forward.1} parent=5 // pred_check
      _
    $region30: #{concat_forward.1} parent=5 // pred_check_branch
      %162 = sbr.rel (%p159) target = $region32
    $region31: #{concat_forward.1} parent=5 // pred_region
      %s163 = ssub.s32 %s9, 1
      %s164 = smul.u32 2, %s19
      %p165 = scmp.lt.s32.totalorder %s18, 1
      %s166 = scalar_select %p165, %s18, 1
      %p167 = scmp.lt.s32.totalorder %s164, 1
      %s168 = scalar_select %p167, %s164, 1
      %s169 = smul.addr %s166, 2
      %s170 = sadd.s32 %s168, %s169
      %s171 = smul.addr %s170, 4
      %s172 = scalar_lea.vmem %s0, %s171
      %p173 = pneg %p49
      %p174 = pneg %p46
      %p175 = pneg %p70
      %p176 = pneg %p67
      %p177 = pneg %p91
      %p178 = pneg %p88
      %p179 = pneg %p119
      %p180 = pneg %p116
      %s181 = smul.u32 2, %s19
      %p182 = scmp.lt.s32.totalorder %s18, 1
      %s183 = scalar_select %p182, %s18, 1
      %p184 = scmp.lt.s32.totalorder %s181, 1
      %s185 = scalar_select %p184, %s181, 1
      %s186 = smul.addr %s183, 96
      %s187 = sadd.s32 %s185, %s186
      %s188 = smul.addr %s187, 8
      %s189 = scalar_lea.vmem %s3, %s188
      %s190 = smul.u32 2, %s19
      %p191 = scmp.lt.s32.totalorder %s18, 1
      %s192 = scalar_select %p191, %s18, 1
      %p193 = scmp.lt.s32.totalorder %s190, 1
      %s194 = scalar_select %p193, %s190, 1
      %s195 = smul.addr %s192, 2
      %s196 = sadd.s32 %s194, %s195
      %s197 = smul.addr %s196, 4
      %s198 = scalar_lea.vmem %s0, %s197
      %s199 = smul.u32 2, %s19
      %s200 = smul.u32 2, %s19
      %p201 = scmp.lt.s32.totalorder %s18, 1
      %s202 = scalar_select %p201, %s18, 1
      %p203 = scmp.lt.s32.totalorder %s200, 1
      %s204 = scalar_select %p203, %s200, 1
      %s205 = smul.addr %s202, 96
      %s206 = sadd.s32 %s204, %s205
      %s207 = smul.addr %s206, 8
      %s208 = scalar_lea.vmem %s3, %s207
      %s209 = smul.u32 2, %s19
      %v210 = vld [vmem:[%s198] sm:$0xff]
      %v211 = vld [vmem:[%s1] sm:$0xff]
      %v212 = vld [vmem:[%s1 + $0x8] sm:$0xff]
      %v213 = vld [vmem:[%s1 + $0x10] sm:$0xff]
      %v214 = vld [vmem:[%s1 + $0x18] sm:$0xff]
      %v215 = vld [vmem:[%s1 + $0x20] sm:$0xff]
      %v216 = vld [vmem:[%s1 + $0x28] sm:$0xff]
      %v217 = vld [vmem:[%s1 + $0x30] sm:$0xff]
      %v218 = vld [vmem:[%s1 + $0x38] sm:$0xff]
      %v219 = vld [vmem:[%s1 + $0x40] sm:$0xff]
      %v220 = vld [vmem:[%s1 + $0x48] sm:$0xff]
      %v221 = vld [vmem:[%s1 + $0x50] sm:$0xff]
      %v222 = vld [vmem:[%s1 + $0x58] sm:$0xff]
      %v223 = vld [vmem:[%s1 + $0x60] sm:$0xff]
      %v224 = vld [vmem:[%s1 + $0x68] sm:$0xff]
      %v225 = vld [vmem:[%s1 + $0x70] sm:$0xff]
      %v226 = vld [vmem:[%s1 + $0x78] sm:$0xff]
      %v227 = vld [vmem:[%s1 + $0x80] sm:$0xff]
      %v228 = vld [vmem:[%s1 + $0x88] sm:$0xff]
      %v229 = vld [vmem:[%s1 + $0x90] sm:$0xff]
      %v230 = vld [vmem:[%s1 + $0x98] sm:$0xff]
      %v231 = vld [vmem:[%s1 + $0xa0] sm:$0xff]
      %v232 = vld [vmem:[%s1 + $0xa8] sm:$0xff]
      %v233 = vld [vmem:[%s1 + $0xb0] sm:$0xff]
      %v234 = vld [vmem:[%s1 + $0xb8] sm:$0xff]
      %v235 = vld [vmem:[%s1 + $0xc0] sm:$0xff]
      %v236 = vld [vmem:[%s1 + $0xc8] sm:$0xff]
      %v237 = vld [vmem:[%s1 + $0xd0] sm:$0xff]
      %v238 = vld [vmem:[%s1 + $0xd8] sm:$0xff]
      %v239 = vld [vmem:[%s1 + $0xe0] sm:$0xff]
      %v240 = vld [vmem:[%s1 + $0xe8] sm:$0xff]
      %v241 = vld [vmem:[%s1 + $0xf0] sm:$0xff]
      %v242 = vld [vmem:[%s1 + $0xf8] sm:$0xff]
      %v243 = vld [vmem:[%s1 + $0x100] sm:$0xff]
      %v244 = vld [vmem:[%s1 + $0x108] sm:$0xff]
      %v245 = vld [vmem:[%s1 + $0x110] sm:$0xff]
      %v246 = vld [vmem:[%s1 + $0x118] sm:$0xff]
      %v247 = vld [vmem:[%s1 + $0x120] sm:$0xff]
      %v248 = vld [vmem:[%s1 + $0x128] sm:$0xff]
      %v249 = vld [vmem:[%s1 + $0x130] sm:$0xff]
      %v250 = vld [vmem:[%s1 + $0x138] sm:$0xff]
      %v251 = vld [vmem:[%s1 + $0x140] sm:$0xff]
      %v252 = vld [vmem:[%s1 + $0x148] sm:$0xff]
      %v253 = vld [vmem:[%s1 + $0x150] sm:$0xff]
      %v254 = vld [vmem:[%s1 + $0x158] sm:$0xff]
      %v255 = vld [vmem:[%s1 + $0x160] sm:$0xff]
      %v256 = vld [vmem:[%s1 + $0x168] sm:$0xff]
      %v257 = vld [vmem:[%s1 + $0x170] sm:$0xff]
      %v258 = vld [vmem:[%s1 + $0x178] sm:$0xff]
      %v259 = vld [vmem:[%s2] sm:$0xff]
      %v260 = vld [vmem:[%s2 + $0x8] sm:$0xff]
      %v261 = vld [vmem:[%s2 + $0x10] sm:$0xff]
      %v262 = vld [vmem:[%s2 + $0x18] sm:$0xff]
      %v263 = vld [vmem:[%s2 + $0x20] sm:$0xff]
      %v264 = vld [vmem:[%s2 + $0x28] sm:$0xff]
      %v265 = vld [vmem:[%s2 + $0x30] sm:$0xff]
      %v266 = vld [vmem:[%s2 + $0x38] sm:$0xff]
      %v267 = vld [vmem:[%s2 + $0x40] sm:$0xff]
      %v268 = vld [vmem:[%s2 + $0x48] sm:$0xff]
      %v269 = vld [vmem:[%s2 + $0x50] sm:$0xff]
      %v270 = vld [vmem:[%s2 + $0x58] sm:$0xff]
      %v271 = vld [vmem:[%s2 + $0x60] sm:$0xff]
      %v272 = vld [vmem:[%s2 + $0x68] sm:$0xff]
      %v273 = vld [vmem:[%s2 + $0x70] sm:$0xff]
      %v274 = vld [vmem:[%s2 + $0x78] sm:$0xff]
      %v275 = vld [vmem:[%s2 + $0x80] sm:$0xff]
      %v276 = vld [vmem:[%s2 + $0x88] sm:$0xff]
      %v277 = vld [vmem:[%s2 + $0x90] sm:$0xff]
      %v278 = vld [vmem:[%s2 + $0x98] sm:$0xff]
      %v279 = vld [vmem:[%s2 + $0xa0] sm:$0xff]
      %v280 = vld [vmem:[%s2 + $0xa8] sm:$0xff]
      %v281 = vld [vmem:[%s2 + $0xb0] sm:$0xff]
      %v282 = vld [vmem:[%s2 + $0xb8] sm:$0xff]
      %v283 = vld [vmem:[%s2 + $0xc0] sm:$0xff]
      %v284 = vld [vmem:[%s2 + $0xc8] sm:$0xff]
      %v285 = vld [vmem:[%s2 + $0xd0] sm:$0xff]
      %v286 = vld [vmem:[%s2 + $0xd8] sm:$0xff]
      %v287 = vld [vmem:[%s2 + $0xe0] sm:$0xff]
      %v288 = vld [vmem:[%s2 + $0xe8] sm:$0xff]
      %v289 = vld [vmem:[%s2 + $0xf0] sm:$0xff]
      %v290 = vld [vmem:[%s2 + $0xf8] sm:$0xff]
      %v291 = vld [vmem:[%s2 + $0x100] sm:$0xff]
      %v292 = vld [vmem:[%s2 + $0x108] sm:$0xff]
      %v293 = vld [vmem:[%s2 + $0x110] sm:$0xff]
      %v294 = vld [vmem:[%s2 + $0x118] sm:$0xff]
      %v295 = vld [vmem:[%s2 + $0x120] sm:$0xff]
      %v296 = vld [vmem:[%s2 + $0x128] sm:$0xff]
      %v297 = vld [vmem:[%s2 + $0x130] sm:$0xff]
      %v298 = vld [vmem:[%s2 + $0x138] sm:$0xff]
      %v299 = vld [vmem:[%s2 + $0x140] sm:$0xff]
      %v300 = vld [vmem:[%s2 + $0x148] sm:$0xff]
      %v301 = vld [vmem:[%s2 + $0x150] sm:$0xff]
      %v302 = vld [vmem:[%s2 + $0x158] sm:$0xff]
      %v303 = vld [vmem:[%s2 + $0x160] sm:$0xff]
      %v304 = vld [vmem:[%s2 + $0x168] sm:$0xff]
      %v305 = vld [vmem:[%s2 + $0x170] sm:$0xff]
      %v306 = vld [vmem:[%s2 + $0x178] sm:$0xff]
      %308 = vset.pattern.permute.xlu0 0
      %309 = vperm.xlu0 %308, %v259
      %v310 = vpop.permute.xlu0 %309
      %313 = vset.pattern.permute.xlu0 0
      %314 = vperm.xlu0 %313, %v260
      %v315 = vpop.permute.xlu0 %314
      %318 = vset.pattern.permute.xlu0 0
      %319 = vperm.xlu0 %318, %v261
      %v320 = vpop.permute.xlu0 %319
      %323 = vset.pattern.permute.xlu0 0
      %324 = vperm.xlu0 %323, %v262
      %v325 = vpop.permute.xlu0 %324
      %328 = vset.pattern.permute.xlu0 0
      %329 = vperm.xlu0 %328, %v263
      %v330 = vpop.permute.xlu0 %329
      %333 = vset.pattern.permute.xlu0 0
      %334 = vperm.xlu0 %333, %v264
      %v335 = vpop.permute.xlu0 %334
      %338 = vset.pattern.permute.xlu0 0
      %339 = vperm.xlu0 %338, %v265
      %v340 = vpop.permute.xlu0 %339
      %343 = vset.pattern.permute.xlu0 0
      %344 = vperm.xlu0 %343, %v266
      %v345 = vpop.permute.xlu0 %344
      %348 = vset.pattern.permute.xlu0 0
      %349 = vperm.xlu0 %348, %v267
      %v350 = vpop.permute.xlu0 %349
      %353 = vset.pattern.permute.xlu0 0
      %354 = vperm.xlu0 %353, %v268
      %v355 = vpop.permute.xlu0 %354
      %358 = vset.pattern.permute.xlu0 0
      %359 = vperm.xlu0 %358, %v269
      %v360 = vpop.permute.xlu0 %359
      %363 = vset.pattern.permute.xlu0 0
      %364 = vperm.xlu0 %363, %v270
      %v365 = vpop.permute.xlu0 %364
      %368 = vset.pattern.permute.xlu0 0
      %369 = vperm.xlu0 %368, %v271
      %v370 = vpop.permute.xlu0 %369
      %373 = vset.pattern.permute.xlu0 0
      %374 = vperm.xlu0 %373, %v272
      %v375 = vpop.permute.xlu0 %374
      %378 = vset.pattern.permute.xlu0 0
      %379 = vperm.xlu0 %378, %v273
      %v380 = vpop.permute.xlu0 %379
      %383 = vset.pattern.permute.xlu0 0
      %384 = vperm.xlu0 %383, %v274
      %v385 = vpop.permute.xlu0 %384
      %388 = vset.pattern.permute.xlu0 0
      %389 = vperm.xlu0 %388, %v275
      %v390 = vpop.permute.xlu0 %389
      %393 = vset.pattern.permute.xlu0 0
      %394 = vperm.xlu0 %393, %v276
      %v395 = vpop.permute.xlu0 %394
      %398 = vset.pattern.permute.xlu0 0
      %399 = vperm.xlu0 %398, %v277
      %v400 = vpop.permute.xlu0 %399
      %403 = vset.pattern.permute.xlu0 0
      %404 = vperm.xlu0 %403, %v278
      %v405 = vpop.permute.xlu0 %404
      %408 = vset.pattern.permute.xlu0 0
      %409 = vperm.xlu0 %408, %v279
      %v410 = vpop.permute.xlu0 %409
      %413 = vset.pattern.permute.xlu0 0
      %414 = vperm.xlu0 %413, %v280
      %v415 = vpop.permute.xlu0 %414
      %418 = vset.pattern.permute.xlu0 0
      %419 = vperm.xlu0 %418, %v281
      %v420 = vpop.permute.xlu0 %419
      %423 = vset.pattern.permute.xlu0 0
      %424 = vperm.xlu0 %423, %v282
      %v425 = vpop.permute.xlu0 %424
      %428 = vset.pattern.permute.xlu0 0
      %429 = vperm.xlu0 %428, %v283
      %v430 = vpop.permute.xlu0 %429
      %433 = vset.pattern.permute.xlu0 0
      %434 = vperm.xlu0 %433, %v284
      %v435 = vpop.permute.xlu0 %434
      %438 = vset.pattern.permute.xlu0 0
      %439 = vperm.xlu0 %438, %v285
      %v440 = vpop.permute.xlu0 %439
      %443 = vset.pattern.permute.xlu0 0
      %444 = vperm.xlu0 %443, %v286
      %v445 = vpop.permute.xlu0 %444
      %448 = vset.pattern.permute.xlu0 0
      %449 = vperm.xlu0 %448, %v287
      %v450 = vpop.permute.xlu0 %449
      %453 = vset.pattern.permute.xlu0 0
      %454 = vperm.xlu0 %453, %v288
      %v455 = vpop.permute.xlu0 %454
      %458 = vset.pattern.permute.xlu0 0
      %459 = vperm.xlu0 %458, %v289
      %v460 = vpop.permute.xlu0 %459
      %463 = vset.pattern.permute.xlu0 0
      %464 = vperm.xlu0 %463, %v290
      %v465 = vpop.permute.xlu0 %464
      %468 = vset.pattern.permute.xlu0 0
      %469 = vperm.xlu0 %468, %v291
      %v470 = vpop.permute.xlu0 %469
      %473 = vset.pattern.permute.xlu0 0
      %474 = vperm.xlu0 %473, %v292
      %v475 = vpop.permute.xlu0 %474
      %478 = vset.pattern.permute.xlu0 0
      %479 = vperm.xlu0 %478, %v293
      %v480 = vpop.permute.xlu0 %479
      %483 = vset.pattern.permute.xlu0 0
      %484 = vperm.xlu0 %483, %v294
      %v485 = vpop.permute.xlu0 %484
      %488 = vset.pattern.permute.xlu0 0
      %489 = vperm.xlu0 %488, %v295
      %v490 = vpop.permute.xlu0 %489
      %493 = vset.pattern.permute.xlu0 0
      %494 = vperm.xlu0 %493, %v296
      %v495 = vpop.permute.xlu0 %494
      %498 = vset.pattern.permute.xlu0 0
      %499 = vperm.xlu0 %498, %v297
      %v500 = vpop.permute.xlu0 %499
      %503 = vset.pattern.permute.xlu0 0
      %504 = vperm.xlu0 %503, %v298
      %v505 = vpop.permute.xlu0 %504
      %508 = vset.pattern.permute.xlu0 0
      %509 = vperm.xlu0 %508, %v299
      %v510 = vpop.permute.xlu0 %509
      %513 = vset.pattern.permute.xlu0 0
      %514 = vperm.xlu0 %513, %v300
      %v515 = vpop.permute.xlu0 %514
      %518 = vset.pattern.permute.xlu0 0
      %519 = vperm.xlu0 %518, %v301
      %v520 = vpop.permute.xlu0 %519
      %523 = vset.pattern.permute.xlu0 0
      %524 = vperm.xlu0 %523, %v302
      %v525 = vpop.permute.xlu0 %524
      %528 = vset.pattern.permute.xlu0 0
      %529 = vperm.xlu0 %528, %v303
      %v530 = vpop.permute.xlu0 %529
      %533 = vset.pattern.permute.xlu0 0
      %534 = vperm.xlu0 %533, %v304
      %v535 = vpop.permute.xlu0 %534
      %538 = vset.pattern.permute.xlu0 0
      %539 = vperm.xlu0 %538, %v305
      %v540 = vpop.permute.xlu0 %539
      %543 = vset.pattern.permute.xlu0 0
      %544 = vperm.xlu0 %543, %v306
      %v545 = vpop.permute.xlu0 %544
      %v548 = vcombine.high %v210, %v210
      %vm549 = vcmask 31744
      %v551 = vsel %vm549, %v211, 0
      %v554 = vsel %vm549, %v212, 0
      %v557 = vsel %vm549, %v213, 0
      %v560 = vsel %vm549, %v214, 0
      %v563 = vsel %vm549, %v215, 0
      %v566 = vsel %vm549, %v216, 0
      %v569 = vsel %vm549, %v217, 0
      %v572 = vsel %vm549, %v218, 0
      %v575 = vsel %vm549, %v219, 0
      %v578 = vsel %vm549, %v220, 0
      %v581 = vsel %vm549, %v221, 0
      %v584 = vsel %vm549, %v222, 0
      %v587 = vsel %vm549, %v223, 0
      %v590 = vsel %vm549, %v224, 0
      %v593 = vsel %vm549, %v225, 0
      %v596 = vsel %vm549, %v226, 0
      %v599 = vsel %vm549, %v227, 0
      %v602 = vsel %vm549, %v228, 0
      %v605 = vsel %vm549, %v229, 0
      %v608 = vsel %vm549, %v230, 0
      %v611 = vsel %vm549, %v231, 0
      %v614 = vsel %vm549, %v232, 0
      %v617 = vsel %vm549, %v233, 0
      %v620 = vsel %vm549, %v234, 0
      %v623 = vsel %vm549, %v235, 0
      %v626 = vsel %vm549, %v236, 0
      %v629 = vsel %vm549, %v237, 0
      %v632 = vsel %vm549, %v238, 0
      %v635 = vsel %vm549, %v239, 0
      %v638 = vsel %vm549, %v240, 0
      %v641 = vsel %vm549, %v241, 0
      %v644 = vsel %vm549, %v242, 0
      %v647 = vsel %vm549, %v243, 0
      %v650 = vsel %vm549, %v244, 0
      %v653 = vsel %vm549, %v245, 0
      %v656 = vsel %vm549, %v246, 0
      %v659 = vsel %vm549, %v247, 0
      %v662 = vsel %vm549, %v248, 0
      %v665 = vsel %vm549, %v249, 0
      %v668 = vsel %vm549, %v250, 0
      %v671 = vsel %vm549, %v251, 0
      %v674 = vsel %vm549, %v252, 0
      %v677 = vsel %vm549, %v253, 0
      %v680 = vsel %vm549, %v254, 0
      %v683 = vsel %vm549, %v255, 0
      %v686 = vsel %vm549, %v256, 0
      %v689 = vsel %vm549, %v257, 0
      %v692 = vsel %vm549, %v258, 0
      %vm694 = vcmask 1043456
      %v695 = vsel %vm694, %v210, 0
      %v697 = vsel %vm694, %v548, 0
      %699 = vmatprep.subr.mxu0 %v697
      %700 = vmatpush1.msra.mxu0 %v695
      %701 = vmatprep.subr.mxu0 0.0
      %702 = vmatpush1.msra.mxu0 0.0
      %703 = vmatprep.subr.mxu0 0.0
      %704 = vmatpush1.msra.mxu0 0.0
      %705 = vmatprep.subr.mxu0 0.0
      %706 = vmatpush1.msra.mxu0 0.0
      %707 = vmatprep.subr.mxu0 0.0
      %708 = vmatpush1.msra.mxu0 0.0
      %709 = vmatprep.subr.mxu0 0.0
      %710 = vmatpush1.msra.mxu0 0.0
      %711 = vmatprep.subr.mxu0 0.0
      %712 = vmatpush1.msra.mxu0 0.0
      %713 = vmatprep.subr.mxu0 0.0
      %714 = vmatpush1.msra.mxu0 0.0
      %715 = vmatprep.subr.mxu0 0.0
      %716 = vmatpush1.msra.mxu0 0.0
      %717 = vmatprep.subr.mxu0 0.0
      %718 = vmatpush1.msra.mxu0 0.0
      %719 = vmatprep.subr.mxu0 0.0
      %720 = vmatpush1.msra.mxu0 0.0
      %721 = vmatprep.subr.mxu0 0.0
      %722 = vmatpush1.msra.mxu0 0.0
      %723 = vmatprep.subr.mxu0 0.0
      %724 = vmatpush1.msra.mxu0 0.0
      %725 = vmatprep.subr.mxu0 0.0
      %726 = vmatpush1.msra.mxu0 0.0
      %727 = vmatprep.subr.mxu0 0.0
      %728 = vmatpush1.msra.mxu0 0.0
      %729 = vmatprep.subr.mxu0 0.0
      %730 = vmatpush1.msra.mxu0 0.0
      %731 = vmatprep.subr.mxu0 0.0
      %732 = vmatpush1.msra.mxu0 0.0
      %733 = vmatprep.subr.mxu0 0.0
      %734 = vmatpush1.msra.mxu0 0.0
      %735 = vmatprep.subr.mxu0 0.0
      %736 = vmatpush1.msra.mxu0 0.0
      %737 = vmatprep.subr.mxu0 0.0
      %738 = vmatpush1.msra.mxu0 0.0
      %739 = vmatprep.subr.mxu0 0.0
      %740 = vmatpush1.msra.mxu0 0.0
      %741 = vmatprep.subr.mxu0 0.0
      %742 = vmatpush1.msra.mxu0 0.0
      %743 = vmatprep.subr.mxu0 0.0
      %744 = vmatpush1.msra.mxu0 0.0
      %745 = vmatprep.subr.mxu0 0.0
      %746 = vmatpush1.msra.mxu0 0.0
      %747 = vmatprep.subr.mxu0 0.0
      %748 = vmatpush1.msra.mxu0 0.0
      %749 = vmatprep.subr.mxu0 0.0
      %750 = vmatpush1.msra.mxu0 0.0
      %751 = vmatprep.subr.mxu0 0.0
      %752 = vmatpush1.msra.mxu0 0.0
      %753 = vmatprep.subr.mxu0 0.0
      %754 = vmatpush1.msra.mxu0 0.0
      %755 = vmatprep.subr.mxu0 0.0
      %756 = vmatpush1.msra.mxu0 0.0
      %757 = vmatprep.subr.mxu0 0.0
      %758 = vmatpush1.msra.mxu0 0.0
      %759 = vmatprep.subr.mxu0 0.0
      %760 = vmatpush1.msra.mxu0 0.0
      %761 = vmatprep.subr.mxu0 0.0
      %762 = vmatpush1.msra.mxu0 0.0
      %763 = vmatprep.mubr.f32.mxu0 0.0
      %764 = vmatmul.mubr.f32.gmra.mrb[0].mxu0 %v551
      %v765 = vpop.f32.mrb[0].mxu0
      %v766 = vadd.f32 %v310, %v765
      %v767 = vpop.f32.mrb[0].mxu0
      %v768 = vadd.f32 %v310, %v767
      %769 = vmatprep.mubr.f32.mxu0 0.0
      %770 = vmatmul.mubr.f32.gmra.mrb[0].mxu0 %v554
      %v771 = vpop.f32.mrb[0].mxu0
      %v772 = vadd.f32 %v315, %v771
      %v773 = vpop.f32.mrb[0].mxu0
      %v774 = vadd.f32 %v315, %v773
      %775 = vmatprep.mubr.f32.mxu0 0.0
      %776 = vmatmul.mubr.f32.gmra.mrb[0].mxu0 %v557
      %v777 = vpop.f32.mrb[0].mxu0
      %v778 = vadd.f32 %v320, %v777
      %v779 = vpop.f32.mrb[0].mxu0
      %v780 = vadd.f32 %v320, %v779
      %781 = vmatprep.mubr.f32.mxu0 0.0
      %782 = vmatmul.mubr.f32.gmra.mrb[0].mxu0 %v560
      %v783 = vpop.f32.mrb[0].mxu0
      %v784 = vadd.f32 %v325, %v783
      %v785 = vpop.f32.mrb[0].mxu0
      %v786 = vadd.f32 %v325, %v785
      %787 = vmatprep.mubr.f32.mxu0 0.0
      %788 = vmatmul.mubr.f32.gmra.mrb[0].mxu0 %v563
      %v789 = vpop.f32.mrb[0].mxu0
      %v790 = vadd.f32 %v330, %v789
      %v791 = vpop.f32.mrb[0].mxu0
      %v792 = vadd.f32 %v330, %v791
      %793 = vmatprep.mubr.f32.mxu0 0.0
      %794 = vmatmul.mubr.f32.gmra.mrb[0].mxu0 %v566
      %v795 = vpop.f32.mrb[0].mxu0
      %v796 = vadd.f32 %v335, %v795
      %v797 = vpop.f32.mrb[0].mxu0
      %v798 = vadd.f32 %v335, %v797
      %799 = vmatprep.mubr.f32.mxu0 0.0
      %800 = vmatmul.mubr.f32.gmra.mrb[0].mxu0 %v569
      %v801 = vpop.f32.mrb[0].mxu0
      %v802 = vadd.f32 %v340, %v801
      %v803 = vpop.f32.mrb[0].mxu0
      %v804 = vadd.f32 %v340, %v803
      %805 = vmatprep.mubr.f32.mxu0 0.0
      %806 = vmatmul.mubr.f32.gmra.mrb[0].mxu0 %v572
      %v807 = vpop.f32.mrb[0].mxu0
      %v808 = vadd.f32 %v345, %v807
      %v809 = vpop.f32.mrb[0].mxu0
      %v810 = vadd.f32 %v345, %v809
      %811 = vmatprep.mubr.f32.mxu0 0.0
      %812 = vmatmul.mubr.f32.gmra.mrb[0].mxu0 %v575
      %v813 = vpop.f32.mrb[0].mxu0
      %v814 = vadd.f32 %v350, %v813
      %v815 = vpop.f32.mrb[0].mxu0
      %v816 = vadd.f32 %v350, %v815
      %817 = vmatprep.mubr.f32.mxu0 0.0
      %818 = vmatmul.mubr.f32.gmra.mrb[0].mxu0 %v578
      %v819 = vpop.f32.mrb[0].mxu0
      %v820 = vadd.f32 %v355, %v819
      %v821 = vpop.f32.mrb[0].mxu0
      %v822 = vadd.f32 %v355, %v821
      %823 = vmatprep.mubr.f32.mxu0 0.0
      %824 = vmatmul.mubr.f32.gmra.mrb[0].mxu0 %v581
      %v825 = vpop.f32.mrb[0].mxu0
      %v826 = vadd.f32 %v360, %v825
      %v827 = vpop.f32.mrb[0].mxu0
      %v828 = vadd.f32 %v360, %v827
      %829 = vmatprep.mubr.f32.mxu0 0.0
      %830 = vmatmul.mubr.f32.gmra.mrb[0].mxu0 %v584
      %v831 = vpop.f32.mrb[0].mxu0
      %v832 = vadd.f32 %v365, %v831
      %v833 = vpop.f32.mrb[0].mxu0
      %v834 = vadd.f32 %v365, %v833
      %835 = vmatprep.mubr.f32.mxu0 0.0
      %836 = vmatmul.mubr.f32.gmra.mrb[0].mxu0 %v587
      %v837 = vpop.f32.mrb[0].mxu0
      %v838 = vadd.f32 %v370, %v837
      %v839 = vpop.f32.mrb[0].mxu0
      %v840 = vadd.f32 %v370, %v839
      %841 = vmatprep.mubr.f32.mxu0 0.0
      %842 = vmatmul.mubr.f32.gmra.mrb[0].mxu0 %v590
      %v843 = vpop.f32.mrb[0].mxu0
      %v844 = vadd.f32 %v375, %v843
      %v845 = vpop.f32.mrb[0].mxu0
      %v846 = vadd.f32 %v375, %v845
      %847 = vmatprep.mubr.f32.mxu0 0.0
      %848 = vmatmul.mubr.f32.gmra.mrb[0].mxu0 %v593
      %v849 = vpop.f32.mrb[0].mxu0
      %v850 = vadd.f32 %v380, %v849
      %v851 = vpop.f32.mrb[0].mxu0
      %v852 = vadd.f32 %v380, %v851
      %853 = vmatprep.mubr.f32.mxu0 0.0
      %854 = vmatmul.mubr.f32.gmra.mrb[0].mxu0 %v596
      %v855 = vpop.f32.mrb[0].mxu0
      %v856 = vadd.f32 %v385, %v855
      %v857 = vpop.f32.mrb[0].mxu0
      %v858 = vadd.f32 %v385, %v857
      %859 = vmatprep.mubr.f32.mxu0 0.0
      %860 = vmatmul.mubr.f32.gmra.mrb[0].mxu0 %v599
      %v861 = vpop.f32.mrb[0].mxu0
      %v862 = vadd.f32 %v390, %v861
      %v863 = vpop.f32.mrb[0].mxu0
      %v864 = vadd.f32 %v390, %v863
      %865 = vmatprep.mubr.f32.mxu0 0.0
      %866 = vmatmul.mubr.f32.gmra.mrb[0].mxu0 %v602
      %v867 = vpop.f32.mrb[0].mxu0
      %v868 = vadd.f32 %v395, %v867
      %v869 = vpop.f32.mrb[0].mxu0
      %v870 = vadd.f32 %v395, %v869
      %871 = vmatprep.mubr.f32.mxu0 0.0
      %872 = vmatmul.mubr.f32.gmra.mrb[0].mxu0 %v605
      %v873 = vpop.f32.mrb[0].mxu0
      %v874 = vadd.f32 %v400, %v873
      %v875 = vpop.f32.mrb[0].mxu0
      %v876 = vadd.f32 %v400, %v875
      %877 = vmatprep.mubr.f32.mxu0 0.0
      %878 = vmatmul.mubr.f32.gmra.mrb[0].mxu0 %v608
      %v879 = vpop.f32.mrb[0].mxu0
      %v880 = vadd.f32 %v405, %v879
      %v881 = vpop.f32.mrb[0].mxu0
      %v882 = vadd.f32 %v405, %v881
      %883 = vmatprep.mubr.f32.mxu0 0.0
      %884 = vmatmul.mubr.f32.gmra.mrb[0].mxu0 %v611
      %v885 = vpop.f32.mrb[0].mxu0
      %v886 = vadd.f32 %v410, %v885
      %v887 = vpop.f32.mrb[0].mxu0
      %v888 = vadd.f32 %v410, %v887
      %889 = vmatprep.mubr.f32.mxu0 0.0
      %890 = vmatmul.mubr.f32.gmra.mrb[0].mxu0 %v614
      %v891 = vpop.f32.mrb[0].mxu0
      %v892 = vadd.f32 %v415, %v891
      %v893 = vpop.f32.mrb[0].mxu0
      %v894 = vadd.f32 %v415, %v893
      %895 = vmatprep.mubr.f32.mxu0 0.0
      %896 = vmatmul.mubr.f32.gmra.mrb[0].mxu0 %v617
      %v897 = vpop.f32.mrb[0].mxu0
      %v898 = vadd.f32 %v420, %v897
      %v899 = vpop.f32.mrb[0].mxu0
      %v900 = vadd.f32 %v420, %v899
      %901 = vmatprep.mubr.f32.mxu0 0.0
      %902 = vmatmul.mubr.f32.gmra.mrb[0].mxu0 %v620
      %v903 = vpop.f32.mrb[0].mxu0
      %v904 = vadd.f32 %v425, %v903
      %v905 = vpop.f32.mrb[0].mxu0
      %v906 = vadd.f32 %v425, %v905
      %907 = vmatprep.mubr.f32.mxu0 0.0
      %908 = vmatmul.mubr.f32.gmra.mrb[0].mxu0 %v623
      %v909 = vpop.f32.mrb[0].mxu0
      %v910 = vadd.f32 %v430, %v909
      %v911 = vpop.f32.mrb[0].mxu0
      %v912 = vadd.f32 %v430, %v911
      %913 = vmatprep.mubr.f32.mxu0 0.0
      %914 = vmatmul.mubr.f32.gmra.mrb[0].mxu0 %v626
      %v915 = vpop.f32.mrb[0].mxu0
      %v916 = vadd.f32 %v435, %v915
      %v917 = vpop.f32.mrb[0].mxu0
      %v918 = vadd.f32 %v435, %v917
      %919 = vmatprep.mubr.f32.mxu0 0.0
      %920 = vmatmul.mubr.f32.gmra.mrb[0].mxu0 %v629
      %v921 = vpop.f32.mrb[0].mxu0
      %v922 = vadd.f32 %v440, %v921
      %v923 = vpop.f32.mrb[0].mxu0
      %v924 = vadd.f32 %v440, %v923
      %925 = vmatprep.mubr.f32.mxu0 0.0
      %926 = vmatmul.mubr.f32.gmra.mrb[0].mxu0 %v632
      %v927 = vpop.f32.mrb[0].mxu0
      %v928 = vadd.f32 %v445, %v927
      %v929 = vpop.f32.mrb[0].mxu0
      %v930 = vadd.f32 %v445, %v929
      %931 = vmatprep.mubr.f32.mxu0 0.0
      %932 = vmatmul.mubr.f32.gmra.mrb[0].mxu0 %v635
      %v933 = vpop.f32.mrb[0].mxu0
      %v934 = vadd.f32 %v450, %v933
      %v935 = vpop.f32.mrb[0].mxu0
      %v936 = vadd.f32 %v450, %v935
      %937 = vmatprep.mubr.f32.mxu0 0.0
      %938 = vmatmul.mubr.f32.gmra.mrb[0].mxu0 %v638
      %v939 = vpop.f32.mrb[0].mxu0
      %v940 = vadd.f32 %v455, %v939
      %v941 = vpop.f32.mrb[0].mxu0
      %v942 = vadd.f32 %v455, %v941
      %943 = vmatprep.mubr.f32.mxu0 0.0
      %944 = vmatmul.mubr.f32.gmra.mrb[0].mxu0 %v641
      %v945 = vpop.f32.mrb[0].mxu0
      %v946 = vadd.f32 %v460, %v945
      %v947 = vpop.f32.mrb[0].mxu0
      %v948 = vadd.f32 %v460, %v947
      %949 = vmatprep.mubr.f32.mxu0 0.0
      %950 = vmatmul.mubr.f32.gmra.mrb[0].mxu0 %v644
      %v951 = vpop.f32.mrb[0].mxu0
      %v952 = vadd.f32 %v465, %v951
      %v953 = vpop.f32.mrb[0].mxu0
      %v954 = vadd.f32 %v465, %v953
      %955 = vmatprep.mubr.f32.mxu0 0.0
      %956 = vmatmul.mubr.f32.gmra.mrb[0].mxu0 %v647
      %v957 = vpop.f32.mrb[0].mxu0
      %v958 = vadd.f32 %v470, %v957
      %v959 = vpop.f32.mrb[0].mxu0
      %v960 = vadd.f32 %v470, %v959
      %961 = vmatprep.mubr.f32.mxu0 0.0
      %962 = vmatmul.mubr.f32.gmra.mrb[0].mxu0 %v650
      %v963 = vpop.f32.mrb[0].mxu0
      %v964 = vadd.f32 %v475, %v963
      %v965 = vpop.f32.mrb[0].mxu0
      %v966 = vadd.f32 %v475, %v965
      %967 = vmatprep.mubr.f32.mxu0 0.0
      %968 = vmatmul.mubr.f32.gmra.mrb[0].mxu0 %v653
      %v969 = vpop.f32.mrb[0].mxu0
      %v970 = vadd.f32 %v480, %v969
      %v971 = vpop.f32.mrb[0].mxu0
      %v972 = vadd.f32 %v480, %v971
      %973 = vmatprep.mubr.f32.mxu0 0.0
      %974 = vmatmul.mubr.f32.gmra.mrb[0].mxu0 %v656
      %v975 = vpop.f32.mrb[0].mxu0
      %v976 = vadd.f32 %v485, %v975
      %v977 = vpop.f32.mrb[0].mxu0
      %v978 = vadd.f32 %v485, %v977
      %979 = vmatprep.mubr.f32.mxu0 0.0
      %980 = vmatmul.mubr.f32.gmra.mrb[0].mxu0 %v659
      %v981 = vpop.f32.mrb[0].mxu0
      %v982 = vadd.f32 %v490, %v981
      %v983 = vpop.f32.mrb[0].mxu0
      %v984 = vadd.f32 %v490, %v983
      %985 = vmatprep.mubr.f32.mxu0 0.0
      %986 = vmatmul.mubr.f32.gmra.mrb[0].mxu0 %v662
      %v987 = vpop.f32.mrb[0].mxu0
      %v988 = vadd.f32 %v495, %v987
      %v989 = vpop.f32.mrb[0].mxu0
      %v990 = vadd.f32 %v495, %v989
      %991 = vmatprep.mubr.f32.mxu0 0.0
      %992 = vmatmul.mubr.f32.gmra.mrb[0].mxu0 %v665
      %v993 = vpop.f32.mrb[0].mxu0
      %v994 = vadd.f32 %v500, %v993
      %v995 = vpop.f32.mrb[0].mxu0
      %v996 = vadd.f32 %v500, %v995
      %997 = vmatprep.mubr.f32.mxu0 0.0
      %998 = vmatmul.mubr.f32.gmra.mrb[0].mxu0 %v668
      %v999 = vpop.f32.mrb[0].mxu0
      %v1000 = vadd.f32 %v505, %v999
      %v1001 = vpop.f32.mrb[0].mxu0
      %v1002 = vadd.f32 %v505, %v1001
      %1003 = vmatprep.mubr.f32.mxu0 0.0
      %1004 = vmatmul.mubr.f32.gmra.mrb[0].mxu0 %v671
      %v1005 = vpop.f32.mrb[0].mxu0
      %v1006 = vadd.f32 %v510, %v1005
      %v1007 = vpop.f32.mrb[0].mxu0
      %v1008 = vadd.f32 %v510, %v1007
      %1009 = vmatprep.mubr.f32.mxu0 0.0
      %1010 = vmatmul.mubr.f32.gmra.mrb[0].mxu0 %v674
      %v1011 = vpop.f32.mrb[0].mxu0
      %v1012 = vadd.f32 %v515, %v1011
      %v1013 = vpop.f32.mrb[0].mxu0
      %v1014 = vadd.f32 %v515, %v1013
      %1015 = vmatprep.mubr.f32.mxu0 0.0
      %1016 = vmatmul.mubr.f32.gmra.mrb[0].mxu0 %v677
      %v1017 = vpop.f32.mrb[0].mxu0
      %v1018 = vadd.f32 %v520, %v1017
      %v1019 = vpop.f32.mrb[0].mxu0
      %v1020 = vadd.f32 %v520, %v1019
      %1021 = vmatprep.mubr.f32.mxu0 0.0
      %1022 = vmatmul.mubr.f32.gmra.mrb[0].mxu0 %v680
      %v1023 = vpop.f32.mrb[0].mxu0
      %v1024 = vadd.f32 %v525, %v1023
      %v1025 = vpop.f32.mrb[0].mxu0
      %v1026 = vadd.f32 %v525, %v1025
      %1027 = vmatprep.mubr.f32.mxu0 0.0
      %1028 = vmatmul.mubr.f32.gmra.mrb[0].mxu0 %v683
      %v1029 = vpop.f32.mrb[0].mxu0
      %v1030 = vadd.f32 %v530, %v1029
      %v1031 = vpop.f32.mrb[0].mxu0
      %v1032 = vadd.f32 %v530, %v1031
      %1033 = vmatprep.mubr.f32.mxu0 0.0
      %1034 = vmatmul.mubr.f32.gmra.mrb[0].mxu0 %v686
      %v1035 = vpop.f32.mrb[0].mxu0
      %v1036 = vadd.f32 %v535, %v1035
      %v1037 = vpop.f32.mrb[0].mxu0
      %v1038 = vadd.f32 %v535, %v1037
      %1039 = vmatprep.mubr.f32.mxu0 0.0
      %1040 = vmatmul.mubr.f32.gmra.mrb[0].mxu0 %v689
      %v1041 = vpop.f32.mrb[0].mxu0
      %v1042 = vadd.f32 %v540, %v1041
      %v1043 = vpop.f32.mrb[0].mxu0
      %v1044 = vadd.f32 %v540, %v1043
      %1045 = vmatprep.mubr.f32.mxu0 0.0
      %1046 = vmatmul.mubr.f32.gmra.mrb[0].mxu0 %v692
      %v1047 = vpop.f32.mrb[0].mxu0
      %v1048 = vadd.f32 %v545, %v1047
      %v1049 = vpop.f32.mrb[0].mxu0
      %v1050 = vadd.f32 %v545, %v1049
      %1051 = vdwg.mxu0
      %1052 = vst [vmem:[%s208] sm:$0xff] %v766
      %1053 = vst [vmem:[%s208 + $0x8] sm:$0xff] %v768
      %1054 = vst [vmem:[%s208 + $0x10] sm:$0xff] %v772
      %1055 = vst [vmem:[%s208 + $0x18] sm:$0xff] %v774
      %1056 = vst [vmem:[%s208 + $0x20] sm:$0xff] %v778
      %1057 = vst [vmem:[%s208 + $0x28] sm:$0xff] %v780
      %1058 = vst [vmem:[%s208 + $0x30] sm:$0xff] %v784
      %1059 = vst [vmem:[%s208 + $0x38] sm:$0xff] %v786
      %1060 = vst [vmem:[%s208 + $0x40] sm:$0xff] %v790
      %1061 = vst [vmem:[%s208 + $0x48] sm:$0xff] %v792
      %1062 = vst [vmem:[%s208 + $0x50] sm:$0xff] %v796
      %1063 = vst [vmem:[%s208 + $0x58] sm:$0xff] %v798
      %1064 = vst [vmem:[%s208 + $0x60] sm:$0xff] %v802
      %1065 = vst [vmem:[%s208 + $0x68] sm:$0xff] %v804
      %1066 = vst [vmem:[%s208 + $0x70] sm:$0xff] %v808
      %1067 = vst [vmem:[%s208 + $0x78] sm:$0xff] %v810
      %1068 = vst [vmem:[%s208 + $0x80] sm:$0xff] %v814
      %1069 = vst [vmem:[%s208 + $0x88] sm:$0xff] %v816
      %1070 = vst [vmem:[%s208 + $0x90] sm:$0xff] %v820
      %1071 = vst [vmem:[%s208 + $0x98] sm:$0xff] %v822
      %1072 = vst [vmem:[%s208 + $0xa0] sm:$0xff] %v826
      %1073 = vst [vmem:[%s208 + $0xa8] sm:$0xff] %v828
      %1074 = vst [vmem:[%s208 + $0xb0] sm:$0xff] %v832
      %1075 = vst [vmem:[%s208 + $0xb8] sm:$0xff] %v834
      %1076 = vst [vmem:[%s208 + $0xc0] sm:$0xff] %v838
      %1077 = vst [vmem:[%s208 + $0xc8] sm:$0xff] %v840
      %1078 = vst [vmem:[%s208 + $0xd0] sm:$0xff] %v844
      %1079 = vst [vmem:[%s208 + $0xd8] sm:$0xff] %v846
      %1080 = vst [vmem:[%s208 + $0xe0] sm:$0xff] %v850
      %1081 = vst [vmem:[%s208 + $0xe8] sm:$0xff] %v852
      %1082 = vst [vmem:[%s208 + $0xf0] sm:$0xff] %v856
      %1083 = vst [vmem:[%s208 + $0xf8] sm:$0xff] %v858
      %1084 = vst [vmem:[%s208 + $0x100] sm:$0xff] %v862
      %1085 = vst [vmem:[%s208 + $0x108] sm:$0xff] %v864
      %1086 = vst [vmem:[%s208 + $0x110] sm:$0xff] %v868
      %1087 = vst [vmem:[%s208 + $0x118] sm:$0xff] %v870
      %1088 = vst [vmem:[%s208 + $0x120] sm:$0xff] %v874
      %1089 = vst [vmem:[%s208 + $0x128] sm:$0xff] %v876
      %1090 = vst [vmem:[%s208 + $0x130] sm:$0xff] %v880
      %1091 = vst [vmem:[%s208 + $0x138] sm:$0xff] %v882
      %1092 = vst [vmem:[%s208 + $0x140] sm:$0xff] %v886
      %1093 = vst [vmem:[%s208 + $0x148] sm:$0xff] %v888
      %1094 = vst [vmem:[%s208 + $0x150] sm:$0xff] %v892
      %1095 = vst [vmem:[%s208 + $0x158] sm:$0xff] %v894
      %1096 = vst [vmem:[%s208 + $0x160] sm:$0xff] %v898
      %1097 = vst [vmem:[%s208 + $0x168] sm:$0xff] %v900
      %1098 = vst [vmem:[%s208 + $0x170] sm:$0xff] %v904
      %1099 = vst [vmem:[%s208 + $0x178] sm:$0xff] %v906
      %1100 = vst [vmem:[%s208 + $0x180] sm:$0xff] %v910
      %1101 = vst [vmem:[%s208 + $0x188] sm:$0xff] %v912
      %1102 = vst [vmem:[%s208 + $0x190] sm:$0xff] %v916
      %1103 = vst [vmem:[%s208 + $0x198] sm:$0xff] %v918
      %1104 = vst [vmem:[%s208 + $0x1a0] sm:$0xff] %v922
      %1105 = vst [vmem:[%s208 + $0x1a8] sm:$0xff] %v924
      %1106 = vst [vmem:[%s208 + $0x1b0] sm:$0xff] %v928
      %1107 = vst [vmem:[%s208 + $0x1b8] sm:$0xff] %v930
      %1108 = vst [vmem:[%s208 + $0x1c0] sm:$0xff] %v934
      %1109 = vst [vmem:[%s208 + $0x1c8] sm:$0xff] %v936
      %1110 = vst [vmem:[%s208 + $0x1d0] sm:$0xff] %v940
      %1111 = vst [vmem:[%s208 + $0x1d8] sm:$0xff] %v942
      %1112 = vst [vmem:[%s208 + $0x1e0] sm:$0xff] %v946
      %1113 = vst [vmem:[%s208 + $0x1e8] sm:$0xff] %v948
      %1114 = vst [vmem:[%s208 + $0x1f0] sm:$0xff] %v952
      %1115 = vst [vmem:[%s208 + $0x1f8] sm:$0xff] %v954
      %1116 = vst [vmem:[%s208 + $0x200] sm:$0xff] %v958
      %1117 = vst [vmem:[%s208 + $0x208] sm:$0xff] %v960
      %1118 = vst [vmem:[%s208 + $0x210] sm:$0xff] %v964
      %1119 = vst [vmem:[%s208 + $0x218] sm:$0xff] %v966
      %1120 = vst [vmem:[%s208 + $0x220] sm:$0xff] %v970
      %1121 = vst [vmem:[%s208 + $0x228] sm:$0xff] %v972
      %1122 = vst [vmem:[%s208 + $0x230] sm:$0xff] %v976
      %1123 = vst [vmem:[%s208 + $0x238] sm:$0xff] %v978
      %1124 = vst [vmem:[%s208 + $0x240] sm:$0xff] %v982
      %1125 = vst [vmem:[%s208 + $0x248] sm:$0xff] %v984
      %1126 = vst [vmem:[%s208 + $0x250] sm:$0xff] %v988
      %1127 = vst [vmem:[%s208 + $0x258] sm:$0xff] %v990
      %1128 = vst [vmem:[%s208 + $0x260] sm:$0xff] %v994
      %1129 = vst [vmem:[%s208 + $0x268] sm:$0xff] %v996
      %1130 = vst [vmem:[%s208 + $0x270] sm:$0xff] %v1000
      %1131 = vst [vmem:[%s208 + $0x278] sm:$0xff] %v1002
      %1132 = vst [vmem:[%s208 + $0x280] sm:$0xff] %v1006
      %1133 = vst [vmem:[%s208 + $0x288] sm:$0xff] %v1008
      %1134 = vst [vmem:[%s208 + $0x290] sm:$0xff] %v1012
      %1135 = vst [vmem:[%s208 + $0x298] sm:$0xff] %v1014
      %1136 = vst [vmem:[%s208 + $0x2a0] sm:$0xff] %v1018
      %1137 = vst [vmem:[%s208 + $0x2a8] sm:$0xff] %v1020
      %1138 = vst [vmem:[%s208 + $0x2b0] sm:$0xff] %v1024
      %1139 = vst [vmem:[%s208 + $0x2b8] sm:$0xff] %v1026
      %1140 = vst [vmem:[%s208 + $0x2c0] sm:$0xff] %v1030
      %1141 = vst [vmem:[%s208 + $0x2c8] sm:$0xff] %v1032
      %1142 = vst [vmem:[%s208 + $0x2d0] sm:$0xff] %v1036
      %1143 = vst [vmem:[%s208 + $0x2d8] sm:$0xff] %v1038
      %1144 = vst [vmem:[%s208 + $0x2e0] sm:$0xff] %v1042
      %1145 = vst [vmem:[%s208 + $0x2e8] sm:$0xff] %v1044
      %1146 = vst [vmem:[%s208 + $0x2f0] sm:$0xff] %v1048
      %1147 = vst [vmem:[%s208 + $0x2f8] sm:$0xff] %v1050
      %s1148 = smul.u32 2, %s19
      %p1149 = scmp.lt.s32.totalorder %s18, 1
      %s1150 = scalar_select %p1149, %s18, 1
      %p1151 = scmp.lt.s32.totalorder %s1148, 1
      %s1152 = scalar_select %p1151, %s1148, 1
      %s1153 = smul.addr %s1150, 96
      %s1154 = sadd.s32 %s1152, %s1153
      %s1155 = smul.addr %s1154, 8
      %s1156 = scalar_lea.vmem %s3, %s1155
      // Predicated region
      $region33: #{concat_forward.1} parent=31 // pred_check
        %p1157 = pneg %p116
      $region34: #{concat_forward.1} parent=31 // pred_check_branch
        %1159 = sbr.rel (%p1157) target = $region36
      $region35: #{concat_forward.1} parent=31 // pred_region
        %s1160 = smul.u32 2, %s19
      $region36: #{concat_forward.1} parent=31 // pred_fallthru
        _
    $region32: #{concat_forward.1} parent=5 // pred_fallthru
      _
    %p1161 = scmp.le.s32.totalorder 2, %s9
    // Predicated region
    $region37: #{concat_forward.1} parent=5 // pred_check
      %p1162 = pneg %p1161
    $region38: #{concat_forward.1} parent=5 // pred_check_branch
      %1164 = sbr.rel (%p1162) target = $region40
    $region39: #{concat_forward.1} parent=5 // pred_region
      %s1165 = ssub.s32 %s9, 2
      // Predicated region
      $region41: #{concat_forward.1} parent=39 // pred_check
        %p1166 = pneg %p122
      $region42: #{concat_forward.1} parent=39 // pred_check_branch
        %1168 = sbr.rel (%p1166) target = $region44
      $region43: #{concat_forward.1} parent=39 // pred_region
        %s1169 = smul.u32 2, %s21
        %p1170 = scmp.lt.s32.totalorder %s20, 1
        %s1171 = scalar_select %p1170, %s20, 1
        %p1172 = scmp.lt.s32.totalorder %s1169, 1
        %s1173 = scalar_select %p1172, %s1169, 1
        %s1174 = smul.addr %s1171, 96
        %s1175 = sadd.s32 %s1173, %s1174
        %s1176 = smul.addr %s1175, 8
        %s1177 = scalar_lea.vmem %s3, %s1176
      $region44: #{concat_forward.1} parent=39 // pred_fallthru
        _
    $region40: #{concat_forward.1} parent=5 // pred_fallthru
      _
  $region6: #{concat_forward.1} parent=0 // loop_footer
    %s13 = sadd.s32 1, %s9
  $region7: #{concat_forward.1} parent=0 // loop_footer_branch
    %8 = sbr.rel target = $region3
  $region8: #{concat_forward.1} parent=0 // loop_exit
    _

</llo_original>
